<compile_context>
chip_gen: v6e
topology: v6e:2x2x1
jax: 0.10.0
libtpu: 0.0.40
codegen_flags: <defaults>
</compile_context>

<pallas_src>
import functools

import jax
import jax.numpy as jnp
from jax.experimental import pallas as pl
from jax.experimental.pallas import tpu as pltpu

_EPS = 1e-6
_LANE = 128
_SUB = 8                  # f32 sublane tile
_ROW_ALIGN = 32           # block_rows alignment (covers f32/bf16/int8 sublane packing)
_BLOCK_ROWS_MAX = 8192    # (8192,128) f32 = 4 MiB per input per pipeline buffer
_SMALL_N = 1 << 17        # below this, XLA-fused jnp beats a pallas_call launch


def _round_up(x, m):
    return (x + m - 1) // m * m


def _num_core_splits():
    # A 2-way grid split only pays off on 2-TensorCore chips (v7x); on v5e/v6e it is a
    # serial outer loop with duplicated init/finalize, so use 1 there.
    try:
        kind = jax.devices()[0].device_kind.lower()
    except Exception:
        return 1
    return 2 if ("v7" in kind or "7x" in kind) else 1


def _masked_l1_kernel(pred_ref, gt_ref, mask_ref, num_ref, den_ref,
                      acc_num, acc_den, *,
                      block_rows, blocks_per_core, valid_rows, needs_mask):
    c = pl.program_id(0)          # core-split axis ("parallel")
    i = pl.program_id(1)          # reduction axis ("arbitrary")

    @pl.when(i == 0)
    def _():
        acc_num[...] = jnp.zeros_like(acc_num)
        acc_den[...] = jnp.zeros_like(acc_den)

    # Unclamped global row offset of this block (used for validity, never for indexing).
    row0 = (c * blocks_per_core + i) * block_rows

    def accumulate(masked):
        p = pred_ref[...].astype(jnp.float32)
        g = gt_ref[...].astype(jnp.float32)
        m = mask_ref[...].astype(jnp.float32)
        num = jnp.abs(p - g) * m
        den = m
        if masked:
            # SELECT invalid rows to 0.0 (not multiply: OOB rows of a partial block may
            # hold garbage/NaN and NaN * 0 == NaN).
            local = jax.lax.broadcasted_iota(jnp.int32, (block_rows, 1), 0)
            valid = (row0 + local) < valid_rows
            num = jnp.where(valid, num, 0.0)
            den = jnp.where(valid, den, 0.0)
        # (block_rows,128) -> (block_rows//8, 8, 128): layout-free split of the
        # sublane-major dim; axis-0 sum is pure vreg-wise VPU adds into a single
        # (8,128) resident accumulator (no per-vreg scratch load/store traffic).
        acc_num[...] += num.reshape(block_rows // _SUB, _SUB, _LANE).sum(axis=0)
        acc_den[...] += den.reshape(block_rows // _SUB, _SUB, _LANE).sum(axis=0)

    if needs_mask:
        is_tail = row0 + block_rows > valid_rows

        @pl.when(is_tail)
        def _():
            accumulate(masked=True)

        @pl.when(jnp.logical_not(is_tail))
        def _():
            accumulate(masked=False)
    else:
        accumulate(masked=False)

    @pl.when(i == pl.num_programs(1) - 1)
    def _():
        # Full-block lane-dense store of the per-core partials; the wrapper does the
        # final cross-lane reduce with jnp.sum.
        num_ref[...] = acc_num[...]
        den_ref[...] = acc_den[...]


def l1_loss(pred, gt, mask, eps=_EPS, *, force_pallas=False):
    n = pred.size
    if n == 0 or (not force_pallas and n <= _SMALL_N):
        # Small-input fast path: pallas_call launch / grid-step overhead dominates.
        p = pred.astype(jnp.float32)
        g = gt.astype(jnp.float32)
        m = mask.astype(jnp.float32)
        return (jnp.abs(p - g) * m).sum() / (m.sum() + jnp.float32(eps))

    # Flatten (free) and pad to a multiple of 8*128 so the 2-D view has sublane-aligned
    # rows; padded zeros contribute nothing to either sum. Native dtype is kept and
    # cast to f32 inside the kernel (bf16/int8 inputs halve/quarter the HBM traffic).
    n_pad = _round_up(n, _SUB * _LANE)

    def prep(x):
        x = jnp.ravel(x)
        if n_pad != n:
            x = jnp.pad(x, (0, n_pad - n))
        return x.reshape(n_pad // _LANE, _LANE)

    pred2d, gt2d, mask2d = prep(pred), prep(gt), prep(mask)
    rows = n_pad // _LANE

    num_cores = _num_core_splits()
    if rows < _ROW_ALIGN * num_cores:
        num_cores = 1

    if num_cores == 1 and rows <= _BLOCK_ROWS_MAX:
        block_rows, blocks_per_core = rows, 1          # single full-dim block, no tail
    else:
        blocks_per_core = pl.cdiv(rows, _BLOCK_ROWS_MAX * num_cores)
        block_rows = _round_up(pl.cdiv(rows, num_cores * blocks_per_core), _ROW_ALIGN)

    total_blocks = num_cores * blocks_per_core
    n_real_blocks = pl.cdiv(rows, block_rows)
    needs_mask = (total_blocks * block_rows != rows)

    def in_map(c, i):
        # Clamp only as a safety net (a fully OOB block, if it ever occurs, is zeroed
        # by the in-kernel row-validity select).
        return (jnp.minimum(c * blocks_per_core + i, n_real_blocks - 1), 0)

    in_spec = pl.BlockSpec((block_rows, _LANE), in_map)
    out_spec = pl.BlockSpec((_SUB, _LANE), lambda c, i: (c, 0))

    kernel = functools.partial(
        _masked_l1_kernel,
        block_rows=block_rows,
        blocks_per_core=blocks_per_core,
        valid_rows=rows,
        needs_mask=needs_mask,
    )

    in_bytes = sum(x.size * x.dtype.itemsize for x in (pred2d, gt2d, mask2d))
    block_bytes = block_rows * _LANE * sum(
        x.dtype.itemsize for x in (pred2d, gt2d, mask2d))
    vmem_limit = min(2 * block_bytes + (8 << 20), 64 << 20)  # 2x = double-buffering

    num, den = pl.pallas_call(
        kernel,
        out_shape=(
            jax.ShapeDtypeStruct((num_cores * _SUB, _LANE), jnp.float32),
            jax.ShapeDtypeStruct((num_cores * _SUB, _LANE), jnp.float32),
        ),
        grid_spec=pltpu.PrefetchScalarGridSpec(
            num_scalar_prefetch=0,
            grid=(num_cores, blocks_per_core),
            in_specs=[in_spec, in_spec, in_spec],
            out_specs=(out_spec, out_spec),
            scratch_shapes=[
                pltpu.VMEM((_SUB, _LANE), jnp.float32),
                pltpu.VMEM((_SUB, _LANE), jnp.float32),
            ],
        ),
        compiler_params=pltpu.CompilerParams(
            dimension_semantics=("parallel", "arbitrary"),
            vmem_limit_bytes=vmem_limit,
        ),
        cost_estimate=pl.CostEstimate(
            flops=5 * n,
            transcendentals=0,
            bytes_accessed=in_bytes + 2 * num_cores * _SUB * _LANE * 4,
        ),
    )(pred2d, gt2d, mask2d)

    # Combine per-core (8,128) partials.
    return jnp.sum(num) / (jnp.sum(den) + jnp.float32(eps))


def _ref_loss(pred, gt, mask, eps=_EPS):
    return (jnp.abs(pred - gt) * mask).sum() / (mask.sum() + eps)


if __name__ == "__main__":
    key = jax.random.PRNGKey(0)
    k1, k2, k3, k4, k5, k6, k7, k8, k9 = jax.random.split(key, 9)

    # Primary check: small NCHW shape consistent with the PyTorch module. Force the
    # Pallas path so the kernel itself is exercised (default would use the fast path).
    shape = (2, 4, 16, 16)
    pred = jax.random.normal(k1, shape, dtype=jnp.float32)
    gt = jax.random.normal(k2, shape, dtype=jnp.float32)
    mask = (jax.random.uniform(k3, shape) > 0.5).astype(jnp.float32)

    loss = l1_loss(pred, gt, mask, force_pallas=True)
    jax.block_until_ready(loss)
    ref = _ref_loss(pred, gt, mask)
    assert jnp.allclose(loss, ref, rtol=1e-5, atol=1e-6), (loss, ref)

    # Default entry point (small-input fast path) must agree as well.
    loss_fp = l1_loss(pred, gt, mask)
    jax.block_until_ready(loss_fp)
    assert jnp.allclose(loss_fp, ref, rtol=1e-5, atol=1e-6), (loss_fp, ref)

    # Secondary check: awkward size exercising the flatten/pad tail through the
    # Pallas path (single full-dim block on 1-TC parts, masked tail on v7x).
    shape2 = (1, 3, 300, 301)
    pred2 = jax.random.normal(k4, shape2, dtype=jnp.float32)
    gt2 = jax.random.normal(k5, shape2, dtype=jnp.float32)
    mask2 = (jax.random.uniform(k6, shape2) > 0.5).astype(jnp.float32)

    loss2 = l1_loss(pred2, gt2, mask2)
    jax.block_until_ready(loss2)
    ref2 = _ref_loss(pred2, gt2, mask2)
    assert jnp.allclose(loss2, ref2, rtol=1e-4, atol=1e-6), (loss2, ref2)

    # Third check: large enough to require multiple grid steps + a masked partial
    # tail block (exercises the accumulator carry and the pl.when tail path).
    shape3 = (1, 3, 640, 601)
    pred3 = jax.random.normal(k7, shape3, dtype=jnp.float32)
    gt3 = jax.random.normal(k8, shape3, dtype=jnp.float32)
    mask3 = (jax.random.uniform(k9, shape3) > 0.5).astype(jnp.float32)

    loss3 = l1_loss(pred3, gt3, mask3)
    jax.block_until_ready(loss3)
    ref3 = _ref_loss(pred3, gt3, mask3)
    assert jnp.allclose(loss3, ref3, rtol=1e-4, atol=1e-6), (loss3, ref3)

    print("KERNEL_OK")
</pallas_src>

<mosaic_0001>
module attributes {stable_mosaic.version = 11 : i64} {
  func.func @_masked_l1_kernel(%arg0: i32, %arg1: i32, %arg2: memref<16x128xf32, #tpu.memory_space<vmem>>, %arg3: memref<16x128xf32, #tpu.memory_space<vmem>>, %arg4: memref<16x128xf32, #tpu.memory_space<vmem>>, %arg5: memref<8x128xf32, #tpu.memory_space<vmem>>, %arg6: memref<8x128xf32, #tpu.memory_space<vmem>>, %arg7: memref<8x128xf32, #tpu.memory_space<vmem>>, %arg8: memref<8x128xf32, #tpu.memory_space<vmem>>) attributes {dimension_semantics = [#tpu.dimension_semantics<parallel>, #tpu.dimension_semantics<arbitrary>], iteration_bounds = array<i64: 1, 1>, scalar_prefetch = 0 : i64, scratch_operands = 2 : i64, tpu.core_type = #tpu.core_type<tc>, window_params = [{transform_indices = @transform_0, window_bounds = array<i64: 16, 128>}, {transform_indices = @transform_1, window_bounds = array<i64: 16, 128>}, {transform_indices = @transform_2, window_bounds = array<i64: 16, 128>}, {transform_indices = @transform_3, window_bounds = array<i64: 8, 128>}, {transform_indices = @transform_4, window_bounds = array<i64: 8, 128>}]} {
    %c0_i32 = arith.constant 0 : i32
    %0 = arith.cmpi eq, %arg1, %c0_i32 : i32
    %1 = arith.extui %0 : i1 to i32
    %c0_i32_0 = arith.constant 0 : i32
    %2 = arith.cmpi ne, %1, %c0_i32_0 : i32
    scf.if %2 {
      %cst_17 = arith.constant 0.000000e+00 : f32
      %22 = vector.broadcast %cst_17 : f32 to vector<8x128xf32>
      %c0_18 = arith.constant 0 : index
      %c0_19 = arith.constant 0 : index
      %23 = vector.load %arg7[%c0_18, %c0_19] : memref<8x128xf32, #tpu.memory_space<vmem>>, vector<8x128xf32>
      tpu.vector_store %arg7[%c0_18, %c0_19], %22 {strides = array<i32>} : memref<8x128xf32, #tpu.memory_space<vmem>>, vector<8x128xf32>,
      %cst_20 = arith.constant 0.000000e+00 : f32
      %24 = vector.broadcast %cst_20 : f32 to vector<8x128xf32>
      %c0_21 = arith.constant 0 : index
      %c0_22 = arith.constant 0 : index
      %25 = vector.load %arg8[%c0_21, %c0_22] : memref<8x128xf32, #tpu.memory_space<vmem>>, vector<8x128xf32>
      tpu.vector_store %arg8[%c0_21, %c0_22], %24 {strides = array<i32>} : memref<8x128xf32, #tpu.memory_space<vmem>>, vector<8x128xf32>,
    } else {
    }
    %c0 = arith.constant 0 : index
    %c0_1 = arith.constant 0 : index
    %3 = vector.load %arg2[%c0, %c0_1] : memref<16x128xf32, #tpu.memory_space<vmem>>, vector<16x128xf32>
    %c0_2 = arith.constant 0 : index
    %c0_3 = arith.constant 0 : index
    %4 = vector.load %arg3[%c0_2, %c0_3] : memref<16x128xf32, #tpu.memory_space<vmem>>, vector<16x128xf32>
    %c0_4 = arith.constant 0 : index
    %c0_5 = arith.constant 0 : index
    %5 = vector.load %arg4[%c0_4, %c0_5] : memref<16x128xf32, #tpu.memory_space<vmem>>, vector<16x128xf32>
    %6 = arith.subf %3, %4 : vector<16x128xf32>
    %7 = math.absf %6 : vector<16x128xf32>
    %8 = arith.mulf %7, %5 : vector<16x128xf32>
    %c0_6 = arith.constant 0 : index
    %c0_7 = arith.constant 0 : index
    %9 = vector.load %arg7[%c0_6, %c0_7] : memref<8x128xf32, #tpu.memory_space<vmem>>, vector<8x128xf32>
    %10 = vector.shape_cast %8 : vector<16x128xf32> to vector<2x8x128xf32>
    %cst = arith.constant dense<0.000000e+00> : vector<8x128xf32>
    %11 = vector.multi_reduction <add>, %10, %cst [0] : vector<2x8x128xf32> to vector<8x128xf32>
    %12 = arith.addf %9, %11 : vector<8x128xf32>
    %c0_8 = arith.constant 0 : index
    %c0_9 = arith.constant 0 : index
    %13 = vector.load %arg7[%c0_8, %c0_9] : memref<8x128xf32, #tpu.memory_space<vmem>>, vector<8x128xf32>
    tpu.vector_store %arg7[%c0_8, %c0_9], %12 {strides = array<i32>} : memref<8x128xf32, #tpu.memory_space<vmem>>, vector<8x128xf32>,
    %c0_10 = arith.constant 0 : index
    %c0_11 = arith.constant 0 : index
    %14 = vector.load %arg8[%c0_10, %c0_11] : memref<8x128xf32, #tpu.memory_space<vmem>>, vector<8x128xf32>
    %15 = vector.shape_cast %5 : vector<16x128xf32> to vector<2x8x128xf32>
    %cst_12 = arith.constant dense<0.000000e+00> : vector<8x128xf32>
    %16 = vector.multi_reduction <add>, %15, %cst_12 [0] : vector<2x8x128xf32> to vector<8x128xf32>
    %17 = arith.addf %14, %16 : vector<8x128xf32>
    %c0_13 = arith.constant 0 : index
    %c0_14 = arith.constant 0 : index
    %18 = vector.load %arg8[%c0_13, %c0_14] : memref<8x128xf32, #tpu.memory_space<vmem>>, vector<8x128xf32>
    tpu.vector_store %arg8[%c0_13, %c0_14], %17 {strides = array<i32>} : memref<8x128xf32, #tpu.memory_space<vmem>>, vector<8x128xf32>,
    %c0_i32_15 = arith.constant 0 : i32
    %19 = arith.cmpi eq, %arg1, %c0_i32_15 : i32
    %20 = arith.extui %19 : i1 to i32
    %c0_i32_16 = arith.constant 0 : i32
    %21 = arith.cmpi ne, %20, %c0_i32_16 : i32
    scf.if %21 {
      %c0_17 = arith.constant 0 : index
      %c0_18 = arith.constant 0 : index
      %22 = vector.load %arg7[%c0_17, %c0_18] : memref<8x128xf32, #tpu.memory_space<vmem>>, vector<8x128xf32>
      %c0_19 = arith.constant 0 : index
      %c0_20 = arith.constant 0 : index
      %23 = vector.load %arg5[%c0_19, %c0_20] : memref<8x128xf32, #tpu.memory_space<vmem>>, vector<8x128xf32>
      tpu.vector_store %arg5[%c0_19, %c0_20], %22 {strides = array<i32>} : memref<8x128xf32, #tpu.memory_space<vmem>>, vector<8x128xf32>,
      %c0_21 = arith.constant 0 : index
      %c0_22 = arith.constant 0 : index
      %24 = vector.load %arg8[%c0_21, %c0_22] : memref<8x128xf32, #tpu.memory_space<vmem>>, vector<8x128xf32>
      %c0_23 = arith.constant 0 : index
      %c0_24 = arith.constant 0 : index
      %25 = vector.load %arg6[%c0_23, %c0_24] : memref<8x128xf32, #tpu.memory_space<vmem>>, vector<8x128xf32>
      tpu.vector_store %arg6[%c0_23, %c0_24], %24 {strides = array<i32>} : memref<8x128xf32, #tpu.memory_space<vmem>>, vector<8x128xf32>,
    } else {
    }
    return
  }
  func.func @transform_0(%arg0: i32, %arg1: i32) -> (i32, i32) {
    %c1_i32 = arith.constant 1 : i32
    %0 = arith.muli %arg0, %c1_i32 : i32
    %1 = arith.addi %0, %arg1 : i32
    %c0_i32 = arith.constant 0 : i32
    %2 = arith.minsi %1, %c0_i32 : i32
    %c0_i32_0 = arith.constant 0 : i32
    %c0_i32_1 = arith.constant 0 : i32
    return %2, %c0_i32_0 : i32, i32
  }
  func.func @transform_1(%arg0: i32, %arg1: i32) -> (i32, i32) {
    %c1_i32 = arith.constant 1 : i32
    %0 = arith.muli %arg0, %c1_i32 : i32
    %1 = arith.addi %0, %arg1 : i32
    %c0_i32 = arith.constant 0 : i32
    %2 = arith.minsi %1, %c0_i32 : i32
    %c0_i32_0 = arith.constant 0 : i32
    %c0_i32_1 = arith.constant 0 : i32
    return %2, %c0_i32_0 : i32, i32
  }
  func.func @transform_2(%arg0: i32, %arg1: i32) -> (i32, i32) {
    %c1_i32 = arith.constant 1 : i32
    %0 = arith.muli %arg0, %c1_i32 : i32
    %1 = arith.addi %0, %arg1 : i32
    %c0_i32 = arith.constant 0 : i32
    %2 = arith.minsi %1, %c0_i32 : i32
    %c0_i32_0 = arith.constant 0 : i32
    %c0_i32_1 = arith.constant 0 : i32
    return %2, %c0_i32_0 : i32, i32
  }
  func.func @transform_3(%arg0: i32, %arg1: i32) -> (i32, i32) {
    %c0_i32 = arith.constant 0 : i32
    %c0_i32_0 = arith.constant 0 : i32
    return %arg0, %c0_i32 : i32, i32
  }
  func.func @transform_4(%arg0: i32, %arg1: i32) -> (i32, i32) {
    %c0_i32 = arith.constant 0 : i32
    %c0_i32_0 = arith.constant 0 : i32
    return %arg0, %c0_i32 : i32, i32
  }
}

</mosaic_0001>

<llo_original>
// kernel: tpu_custom_call.1
$region0: #{tpu_custom_call.1}
  #allocation0 [shape = 'u32[]', space=smem, size = 0x4, offset = 0x4, fixed_abs, tag = 'smem constant byte address 0x4 - core index']
  #allocation1 [shape = 'u32[144,128]{1,0:T(1,128)}', space=vmem, size = 0x12000, scoped, tag = 'internal scratch']
  #allocation2 [shape = 'f32[8,128]{1,0:T(8,128)}', space=vmem, size = 0x1000, scoped, tag = 'scratch operand']
  #allocation3 [shape = 'f32[8,128]{1,0:T(8,128)}', space=vmem, size = 0x1000, scoped, tag = 'scratch operand']
  %s0 = inlined_call_operand.hbm [shape: f32[16,128], index: 0, kind: input, shape index: {}]
  %s1 = inlined_call_operand.hbm [shape: f32[16,128], index: 1, kind: input, shape index: {}]
  %s2 = inlined_call_operand.hbm [shape: f32[16,128], index: 2, kind: input, shape index: {}]
  %s3 = inlined_call_operand.hbm [shape: f32[8,128], index: 3, kind: output, shape index: {0}]
  %s4 = inlined_call_operand.hbm [shape: f32[8,128], index: 4, kind: output, shape index: {1}]
  %5 = xla_tuple %s3, %s4
  %s6 = sld [smem:[#allocation0]]
  $region50: #{tpu_custom_call.1} parent=0
    _
  %s8 = ssub.s32 1, %s6
  %s9 = scalar_select 0, %s8, %s6
  $region1: #{tpu_custom_call.1} parent=0
    #allocation4 [shape = 'u8[8192]{0}', space=vmem, size = 0x2000, scoped, tag = 'input window, operand 0, single buffered']
    #allocation5 [shape = 's32[1]{0}', space=sflag, size = 0x4, scoped, tag = 'scoped memory for tpu_custom_call.1']
    #allocation6 [shape = 's32[1]{0}', space=sflag, size = 0x4, scoped, tag = 'scoped memory for tpu_custom_call.1']
    #allocation7 [shape = 'u8[8192]{0}', space=vmem, size = 0x2000, scoped, tag = 'input window, operand 1, single buffered']
    #allocation8 [shape = 's32[1]{0}', space=sflag, size = 0x4, scoped, tag = 'scoped memory for tpu_custom_call.1']
    #allocation9 [shape = 'u8[8192]{0}', space=vmem, size = 0x2000, scoped, tag = 'input window, operand 2, single buffered']
    #allocation10 [shape = 'u8[4096]{0}', space=vmem, size = 0x1000, scoped, tag = 'output window, operand 0, single buffered']
    #allocation11 [shape = 'u8[4096]{0}', space=vmem, size = 0x1000, scoped, tag = 'output window, operand 1, single buffered']
    #allocation12 [shape = 's32[1]{0}', space=sflag, size = 0x4, scoped, tag = 'scoped memory for tpu_custom_call.1']
    %10 = vsyncpa [#allocation5], 0
    %11 = vsyncpa [#allocation8], 0
    %12 = vsyncpa [#allocation6], 0
    %13 = vsyncpa [#allocation12], 0
    // Predicated region
    $region2: #{tpu_custom_call.1} parent=1 // pred_check
      _
    $region3: #{tpu_custom_call.1} parent=1 // pred_check_branch
      %15 = sbr.rel (0) target = $region5
    $region4: #{tpu_custom_call.1} parent=1 // pred_region
      %s16 = sadd.s32 0, 0
      %p17 = scmp.lt.s32.totalorder %s16, 0
      %s18 = scalar_select %p17, %s16, 0
      %s19 = smul.u32 2, %s18
      %s21 = ssub.s32 256, 256
      %22 = vsyncadd [#allocation5], %s21
      %s23 = smul.addr %s19, 128
      %s24 = scalar_lea.hbm %s0, %s23
      %s25 = sshll.u32 [#allocation4], 4
      %s26 = int_to_ptr.vmem [resolvable:$true] %s25
      %31 = dma.hbm_to_vmem [thread:$0]  %s24, 256, %s26, [#allocation5], 128, 128, 8
    $region5: #{tpu_custom_call.1} parent=1 // pred_fallthru
      _
    // Predicated region
    $region6: #{tpu_custom_call.1} parent=1 // pred_check
      _
    $region7: #{tpu_custom_call.1} parent=1 // pred_check_branch
      %33 = sbr.rel (0) target = $region9
    $region8: #{tpu_custom_call.1} parent=1 // pred_region
      %s34 = sadd.s32 0, 0
      %p35 = scmp.lt.s32.totalorder %s34, 0
      %s36 = scalar_select %p35, %s34, 0
      %s37 = smul.u32 2, %s36
      %s39 = ssub.s32 256, 256
      %40 = vsyncadd [#allocation8], %s39
      %s41 = smul.addr %s37, 128
      %s42 = scalar_lea.hbm %s1, %s41
      %s43 = sshll.u32 [#allocation7], 4
      %s44 = int_to_ptr.vmem [resolvable:$true] %s43
      %49 = dma.hbm_to_vmem [thread:$0]  %s42, 256, %s44, [#allocation8], 128, 128, 8
    $region9: #{tpu_custom_call.1} parent=1 // pred_fallthru
      _
    // Predicated region
    $region10: #{tpu_custom_call.1} parent=1 // pred_check
      _
    $region11: #{tpu_custom_call.1} parent=1 // pred_check_branch
      %51 = sbr.rel (0) target = $region13
    $region12: #{tpu_custom_call.1} parent=1 // pred_region
      %s52 = sadd.s32 0, 0
      %p53 = scmp.lt.s32.totalorder %s52, 0
      %s54 = scalar_select %p53, %s52, 0
      %s55 = smul.u32 2, %s54
      %s57 = ssub.s32 256, 256
      %58 = vsyncadd [#allocation8], %s57
      %s59 = smul.addr %s55, 128
      %s60 = scalar_lea.hbm %s2, %s59
      %s61 = sshll.u32 [#allocation9], 4
      %s62 = int_to_ptr.vmem [resolvable:$true] %s61
      %67 = dma.hbm_to_vmem [thread:$0]  %s60, 256, %s62, [#allocation8], 128, 128, 8
    $region13: #{tpu_custom_call.1} parent=1 // pred_fallthru
      _
    // Predicated region
    $region14: #{tpu_custom_call.1} parent=1 // pred_check
      _
    $region15: #{tpu_custom_call.1} parent=1 // pred_check_branch
      %69 = sbr.rel (0) target = $region17
    $region16: #{tpu_custom_call.1} parent=1 // pred_region
      %70 = dma.done [#allocation5], 256
    $region17: #{tpu_custom_call.1} parent=1 // pred_fallthru
      _
    // Predicated region
    $region18: #{tpu_custom_call.1} parent=1 // pred_check
      _
    $region19: #{tpu_custom_call.1} parent=1 // pred_check_branch
      %72 = sbr.rel (0) target = $region21
    $region20: #{tpu_custom_call.1} parent=1 // pred_region
      %73 = dma.done [#allocation8], 256
    $region21: #{tpu_custom_call.1} parent=1 // pred_fallthru
      _
    // Predicated region
    $region22: #{tpu_custom_call.1} parent=1 // pred_check
      _
    $region23: #{tpu_custom_call.1} parent=1 // pred_check_branch
      %75 = sbr.rel (0) target = $region25
    $region24: #{tpu_custom_call.1} parent=1 // pred_region
      %76 = dma.done [#allocation8], 256
    $region25: #{tpu_custom_call.1} parent=1 // pred_fallthru
      _
    %s77 = sadd.s32 0, 0
    %p78 = scmp.lt.s32.totalorder %s77, 0
    %s79 = scalar_select %p78, %s77, 0
    %s80 = smul.u32 2, %s79
    %s81 = sadd.s32 0, 0
    %p82 = scmp.lt.s32.totalorder %s81, 0
    %s83 = scalar_select %p82, %s81, 0
    %s84 = smul.u32 2, %s83
    %s85 = sadd.s32 0, 0
    %p86 = scmp.lt.s32.totalorder %s85, 0
    %s87 = scalar_select %p86, %s85, 0
    %s88 = smul.u32 2, %s87
    %p89 = scmp.eq.s32.totalorder 0, 0
    // Predicated region
    $region26: #{tpu_custom_call.1} parent=1 // pred_check
      %p90 = pneg %p89
    $region27: #{tpu_custom_call.1} parent=1 // pred_check_branch
      %92 = sbr.rel (%p90) target = $region29
    $region28: #{tpu_custom_call.1} parent=1 // pred_region
      %93 = vst [vmem:[#allocation2] sm:$0xff] 0.0
      %94 = vst [vmem:[#allocation3] sm:$0xff] 0.0
    $region29: #{tpu_custom_call.1} parent=1 // pred_fallthru
      _
    %v95 = vld [vmem:[#allocation4] sm:$0xff]
    %v96 = vld [vmem:[#allocation4 + $0x8] sm:$0xff]
    %v97 = vld [vmem:[#allocation7] sm:$0xff]
    %v98 = vld [vmem:[#allocation7 + $0x8] sm:$0xff]
    %v99 = vld [vmem:[#allocation9] sm:$0xff]
    %v100 = vld [vmem:[#allocation9 + $0x8] sm:$0xff]
    %v101 = vsub.f32 %v95, %v97
    %v102 = vsub.f32 %v96, %v98
    %v103 = vand.u32 2147483647, %v101
    %v104 = vand.u32 2147483647, %v102
    %v105 = vmul.f32 %v103, %v99
    %v106 = vmul.f32 %v104, %v100
    %v107 = vld [vmem:[#allocation2] sm:$0xff]
    %v108 = vadd.f32 %v105, %v106
    %v109 = vadd.f32 %v107, %v108
    %110 = vst [vmem:[#allocation2] sm:$0xff] %v109
    %v111 = vld [vmem:[#allocation3] sm:$0xff]
    %v112 = vadd.f32 %v99, %v100
    %v113 = vadd.f32 %v111, %v112
    %114 = vst [vmem:[#allocation3] sm:$0xff] %v113
    // Predicated region
    $region30: #{tpu_custom_call.1} parent=1 // pred_check
      %p115 = pneg %p89
    $region31: #{tpu_custom_call.1} parent=1 // pred_check_branch
      %117 = sbr.rel (%p115) target = $region33
    $region32: #{tpu_custom_call.1} parent=1 // pred_region
      %v118 = vld [vmem:[#allocation2] sm:$0xff]
      %119 = vst [vmem:[#allocation10] sm:$0xff] %v118
      %v120 = vld [vmem:[#allocation3] sm:$0xff]
      %121 = vst [vmem:[#allocation11] sm:$0xff] %v120
    $region33: #{tpu_custom_call.1} parent=1 // pred_fallthru
      _
    // Predicated region
    $region34: #{tpu_custom_call.1} parent=1 // pred_check
      _
    $region35: #{tpu_custom_call.1} parent=1 // pred_check_branch
      %123 = sbr.rel (0) target = $region37
    $region36: #{tpu_custom_call.1} parent=1 // pred_region
      %s125 = ssub.s32 128, 128
      %126 = vsyncadd [#allocation6], %s125
      %s128 = sshll.u32 [#allocation10], 4
      %s129 = int_to_ptr.vmem [resolvable:$true] %s128
      %131 = dma.vmem_to_hbm [thread:$0]  %s129, 128, %s3, [#allocation6]
    $region37: #{tpu_custom_call.1} parent=1 // pred_fallthru
      _
    // Predicated region
    $region38: #{tpu_custom_call.1} parent=1 // pred_check
      _
    $region39: #{tpu_custom_call.1} parent=1 // pred_check_branch
      %133 = sbr.rel (0) target = $region41
    $region40: #{tpu_custom_call.1} parent=1 // pred_region
      %s135 = ssub.s32 128, 128
      %136 = vsyncadd [#allocation12], %s135
      %s138 = sshll.u32 [#allocation11], 4
      %s139 = int_to_ptr.vmem [resolvable:$true] %s138
      %141 = dma.vmem_to_hbm [thread:$0]  %s139, 128, %s4, [#allocation12]
    $region41: #{tpu_custom_call.1} parent=1 // pred_fallthru
      _
    // Predicated region
    $region42: #{tpu_custom_call.1} parent=1 // pred_check
      _
    $region43: #{tpu_custom_call.1} parent=1 // pred_check_branch
      %143 = sbr.rel (0) target = $region45
    $region44: #{tpu_custom_call.1} parent=1 // pred_region
      %144 = dma.done [#allocation6], 128
    $region45: #{tpu_custom_call.1} parent=1 // pred_fallthru
      _
    // Predicated region
    $region46: #{tpu_custom_call.1} parent=1 // pred_check
      _
    $region47: #{tpu_custom_call.1} parent=1 // pred_check_branch
      %146 = sbr.rel (0) target = $region49
    $region48: #{tpu_custom_call.1} parent=1 // pred_region
      %147 = dma.done [#allocation12], 128
    $region49: #{tpu_custom_call.1} parent=1 // pred_fallthru
      _
    %148 = vsyncpa [#allocation5], 1
    %149 = vsyncpa [#allocation8], 1
    %150 = vsyncpa [#allocation6], 1
    %151 = vsyncpa [#allocation12], 1

</llo_original>
